<compile_context>
chip_gen: v6e
topology: v6e:2x2x1
jax: 0.10.0
libtpu: 0.0.40
codegen_flags: <defaults>
</compile_context>

<pallas_src>
import math
import jax
import jax.numpy as jnp
from jax.experimental import pallas as pl
from jax.experimental.pallas import tpu as pltpu


# ---------------------------------------------------------------------------
# Kernel: fused depthwise-4x4-conv + Linear(C,1)  ==  (TN, F) @ (F, 1) matvec.
# ---------------------------------------------------------------------------
def _epilog_kernel(x_ref, w_ref, out_ref):
    # x_ref: (TN, F) activations, w_ref: (F, 1) folded weights, out_ref: (TN, 1)
    out_ref[...] = jnp.dot(x_ref[...], w_ref[...],
                           preferred_element_type=jnp.float32)


def _round_up(x, m):
    return ((x + m - 1) // m) * m


# ---------------------------------------------------------------------------
# Wrapper
# ---------------------------------------------------------------------------
def epilog_apply(x_nchw, basis_w, linear_w, *, block_n=128):
    """EpilogLayer forward.  x_nchw: (N, C, 4, 4) f32 -> (N,) f32."""
    N, C, H, W = x_nchw.shape
    # The PyTorch module requires 4x4 spatial (Linear expects exactly C features).
    assert H == 4 and W == 4, "EpilogLayer requires 4x4 spatial input"
    F = C * H * W

    # Contiguous (free) flatten in NCHW layout — no in-kernel reshape needed.
    x2 = x_nchw.reshape(N, F)

    # Fold the depthwise-conv weights with the linear weights into one (F, 1)
    # vector.  This is O(C*16) work on parameters (constant-foldable under jit),
    # turning the whole layer into a single fused matvec inside the kernel.
    w_eff = (basis_w.reshape(C, H * W) * linear_w.reshape(C, 1)).reshape(F, 1)
    w_eff = w_eff.astype(jnp.float32)

    # Tile the batch: pad to a sublane-friendly multiple, grid over batch tiles.
    TN = min(block_n, _round_up(N, 8))
    Np = _round_up(N, TN)
    if Np != N:
        x2 = jnp.pad(x2, ((0, Np - N), (0, 0)))

    out = pl.pallas_call(
        _epilog_kernel,
        out_shape=jax.ShapeDtypeStruct((Np, 1), jnp.float32),
        grid=(Np // TN,),
        in_specs=[
            pl.BlockSpec((TN, F), lambda i: (i, 0)),   # activations: batch-tiled
            pl.BlockSpec((F, 1), lambda i: (0, 0)),    # folded weights: resident
        ],
        out_specs=pl.BlockSpec((TN, 1), lambda i: (i, 0)),
        compiler_params=pltpu.CompilerParams(
            dimension_semantics=("parallel",)),
    )(x2, w_eff)

    return out[:N, 0]


def epilog_ref(x_nchw, basis_w, linear_w):
    """Pure-JAX reference matching the PyTorch module exactly."""
    # depthwise 4x4 conv on a 4x4 input == per-channel full reduction
    y = jnp.einsum("nchw,chw->nc", x_nchw, basis_w[:, 0])   # (N, C)
    return jnp.einsum("nc,c->n", y, linear_w[0])            # (N,)


# ---------------------------------------------------------------------------
# Module (MSRInitializer-equivalent init, ActivationGain = 1)
# ---------------------------------------------------------------------------
class EpilogLayerPallas:
    def __init__(self, key, InputChannels):
        k1, k2 = jax.random.split(key)
        # Linear(C, 1, bias=False): weight (1, C); FanIn = C
        self.linear_w = (jax.random.normal(k1, (1, InputChannels), jnp.float32)
                         / math.sqrt(InputChannels))
        # Conv2d(C, C, 4, groups=C, bias=False): weight (C, 1, 4, 4); FanIn = 16
        self.basis_w = (jax.random.normal(k2, (InputChannels, 1, 4, 4), jnp.float32)
                        / math.sqrt(16.0))

    def __call__(self, x_nchw, *, block_n=128):
        return epilog_apply(x_nchw, self.basis_w, self.linear_w, block_n=block_n)


if __name__ == "__main__":
    key = jax.random.PRNGKey(0)
    kx, kp, kx2 = jax.random.split(key, 3)

    # Small shapes consistent with the module: spatial must be 4x4.
    N, C, H, W = 4, 16, 4, 4
    x = jax.random.normal(kx, (N, C, H, W), jnp.float32)

    layer = EpilogLayerPallas(kp, C)
    out = jax.block_until_ready(layer(x))
    assert out.shape == (N,)

    want = epilog_ref(x, layer.basis_w, layer.linear_w)
    assert jnp.allclose(out, want, atol=1e-4, rtol=1e-4)

    # Exercise the batch-tiled grid (>1 step) and the batch-padding path.
    N2 = 37
    x2 = jax.random.normal(kx2, (N2, C, H, W), jnp.float32)
    out2 = jax.block_until_ready(layer(x2, block_n=16))   # TN=16 -> grid of 3
    want2 = epilog_ref(x2, layer.basis_w, layer.linear_w)
    assert out2.shape == (N2,)
    assert jnp.allclose(out2, want2, atol=1e-4, rtol=1e-4)

    print("KERNEL_OK")
</pallas_src>

<mosaic_0001>
module attributes {stable_mosaic.version = 11 : i64} {
  func.func @_epilog_kernel(%arg0: i32, %arg1: memref<8x256xf32, #tpu.memory_space<vmem>>, %arg2: memref<256x1xf32, #tpu.memory_space<vmem>>, %arg3: memref<8x1xf32, #tpu.memory_space<vmem>>) attributes {dimension_semantics = [#tpu.dimension_semantics<parallel>], iteration_bounds = array<i64: 1>, scalar_prefetch = 0 : i64, scratch_operands = 0 : i64, tpu.core_type = #tpu.core_type<tc>, window_params = [{transform_indices = @transform_0, window_bounds = array<i64: 8, 256>}, {pipeline_mode = #tpu.pipeline_mode<synchronous>, transform_indices = @transform_1, window_bounds = array<i64: 256, 1>}, {transform_indices = @transform_2, window_bounds = array<i64: 8, 1>}]} {
    %c0 = arith.constant 0 : index
    %c0_0 = arith.constant 0 : index
    %0 = vector.load %arg1[%c0, %c0_0] : memref<8x256xf32, #tpu.memory_space<vmem>>, vector<8x256xf32>
    %c0_1 = arith.constant 0 : index
    %c0_2 = arith.constant 0 : index
    %1 = vector.load %arg2[%c0_1, %c0_2] : memref<256x1xf32, #tpu.memory_space<vmem>>, vector<256x1xf32>
    %cst = arith.constant dense<0.000000e+00> : vector<8x1xf32>
    %2 = tpu.matmul %0, %1, %cst {dimension_numbers = #tpu.dot_dimension_numbers<[1], [0], [0], [1], [0, 0, 1, 1], [], []>} : vector<8x256xf32>, vector<256x1xf32>, vector<8x1xf32> -> vector<8x1xf32>
    %c0_3 = arith.constant 0 : index
    %c0_4 = arith.constant 0 : index
    %3 = vector.load %arg3[%c0_3, %c0_4] : memref<8x1xf32, #tpu.memory_space<vmem>>, vector<8x1xf32>
    tpu.vector_store %arg3[%c0_3, %c0_4], %2 {strides = array<i32>} : memref<8x1xf32, #tpu.memory_space<vmem>>, vector<8x1xf32>,
    return
  }
  func.func @transform_0(%arg0: i32) -> (i32, i32) {
    %c0_i32 = arith.constant 0 : i32
    %c0_i32_0 = arith.constant 0 : i32
    return %arg0, %c0_i32 : i32, i32
  }
  func.func @transform_1(%arg0: i32) -> (i32, i32) {
    %c0_i32 = arith.constant 0 : i32
    %c0_i32_0 = arith.constant 0 : i32
    %c0_i32_1 = arith.constant 0 : i32
    return %c0_i32, %c0_i32_0 : i32, i32
  }
  func.func @transform_2(%arg0: i32) -> (i32, i32) {
    %c0_i32 = arith.constant 0 : i32
    %c0_i32_0 = arith.constant 0 : i32
    return %arg0, %c0_i32 : i32, i32
  }
}

</mosaic_0001>

<llo_original>
// kernel: tpu_custom_call.1
$region0: #{tpu_custom_call.1}
  #allocation0 [shape = 'u32[]', space=smem, size = 0x4, offset = 0x4, fixed_abs, tag = 'smem constant byte address 0x4 - core index']
  #allocation1 [shape = 'u32[144,128]{1,0:T(1,128)}', space=vmem, size = 0x12000, scoped, tag = 'internal scratch']
  %s0 = inlined_call_operand.vmem [shape: f32[8,256], index: 0, kind: input, shape index: {}]
  %s1 = inlined_call_operand.vmem [shape: f32[256,1], index: 1, kind: input, shape index: {}]
  %s2 = inlined_call_operand.vmem [shape: f32[8,1], index: 2, kind: output, shape index: {}]
  %s3 = sld [smem:[#allocation0]]
  $region18: #{tpu_custom_call.1} parent=0
    _
  %s5 = ssub.s32 1, %s3
  %s6 = scalar_select 0, %s5, %s3
  // Predicated region
  $region2: #{tpu_custom_call.1} parent=0 // pred_check
    _
  $region3: #{tpu_custom_call.1} parent=0 // pred_check_branch
    %8 = sbr.rel (0) target = $region5
  $region4: #{tpu_custom_call.1} parent=0 // pred_region
    _
  $region5: #{tpu_custom_call.1} parent=0 // pred_fallthru
    _
  // Predicated region
  $region6: #{tpu_custom_call.1} parent=0 // pred_check
    _
  $region7: #{tpu_custom_call.1} parent=0 // pred_check_branch
    %10 = sbr.rel (0) target = $region9
  $region8: #{tpu_custom_call.1} parent=0 // pred_region
    _
  $region9: #{tpu_custom_call.1} parent=0 // pred_fallthru
    _
  %v11 = vld [vmem:[%s0] sm:$0xff]
  %v12 = vld [vmem:[%s0 + $0x8] sm:$0xff]
  %v13 = vld [vmem:[%s1] sm:$0xff]
  %v14 = vld [vmem:[%s1 + $0x8] sm:$0xff]
  %v15 = vld [vmem:[%s1 + $0x10] sm:$0xff]
  %v16 = vld [vmem:[%s1 + $0x18] sm:$0xff]
  %v17 = vld [vmem:[%s1 + $0x20] sm:$0xff]
  %v18 = vld [vmem:[%s1 + $0x28] sm:$0xff]
  %v19 = vld [vmem:[%s1 + $0x30] sm:$0xff]
  %v20 = vld [vmem:[%s1 + $0x38] sm:$0xff]
  %v21 = vld [vmem:[%s1 + $0x40] sm:$0xff]
  %v22 = vld [vmem:[%s1 + $0x48] sm:$0xff]
  %v23 = vld [vmem:[%s1 + $0x50] sm:$0xff]
  %v24 = vld [vmem:[%s1 + $0x58] sm:$0xff]
  %v25 = vld [vmem:[%s1 + $0x60] sm:$0xff]
  %v26 = vld [vmem:[%s1 + $0x68] sm:$0xff]
  %v27 = vld [vmem:[%s1 + $0x70] sm:$0xff]
  %v28 = vld [vmem:[%s1 + $0x78] sm:$0xff]
  %v29 = vld [vmem:[%s1 + $0x80] sm:$0xff]
  %v30 = vld [vmem:[%s1 + $0x88] sm:$0xff]
  %v31 = vld [vmem:[%s1 + $0x90] sm:$0xff]
  %v32 = vld [vmem:[%s1 + $0x98] sm:$0xff]
  %v33 = vld [vmem:[%s1 + $0xa0] sm:$0xff]
  %v34 = vld [vmem:[%s1 + $0xa8] sm:$0xff]
  %v35 = vld [vmem:[%s1 + $0xb0] sm:$0xff]
  %v36 = vld [vmem:[%s1 + $0xb8] sm:$0xff]
  %v37 = vld [vmem:[%s1 + $0xc0] sm:$0xff]
  %v38 = vld [vmem:[%s1 + $0xc8] sm:$0xff]
  %v39 = vld [vmem:[%s1 + $0xd0] sm:$0xff]
  %v40 = vld [vmem:[%s1 + $0xd8] sm:$0xff]
  %v41 = vld [vmem:[%s1 + $0xe0] sm:$0xff]
  %v42 = vld [vmem:[%s1 + $0xe8] sm:$0xff]
  %v43 = vld [vmem:[%s1 + $0xf0] sm:$0xff]
  %v44 = vld [vmem:[%s1 + $0xf8] sm:$0xff]
  %45 = vmatprep.subr.mxu0 0.0
  %46 = vmatpush1.msra.mxu0 %v28
  %47 = vmatprep.subr.mxu0 0.0
  %48 = vmatpush1.msra.mxu0 %v27
  %49 = vmatprep.subr.mxu0 0.0
  %50 = vmatpush1.msra.mxu0 %v26
  %51 = vmatprep.subr.mxu0 0.0
  %52 = vmatpush1.msra.mxu0 %v25
  %53 = vmatprep.subr.mxu0 0.0
  %54 = vmatpush1.msra.mxu0 %v24
  %55 = vmatprep.subr.mxu0 0.0
  %56 = vmatpush1.msra.mxu0 %v23
  %57 = vmatprep.subr.mxu0 0.0
  %58 = vmatpush1.msra.mxu0 %v22
  %59 = vmatprep.subr.mxu0 0.0
  %60 = vmatpush1.msra.mxu0 %v21
  %61 = vmatprep.subr.mxu0 0.0
  %62 = vmatpush1.msra.mxu0 %v20
  %63 = vmatprep.subr.mxu0 0.0
  %64 = vmatpush1.msra.mxu0 %v19
  %65 = vmatprep.subr.mxu0 0.0
  %66 = vmatpush1.msra.mxu0 %v18
  %67 = vmatprep.subr.mxu0 0.0
  %68 = vmatpush1.msra.mxu0 %v17
  %69 = vmatprep.subr.mxu0 0.0
  %70 = vmatpush1.msra.mxu0 %v16
  %71 = vmatprep.subr.mxu0 0.0
  %72 = vmatpush1.msra.mxu0 %v15
  %73 = vmatprep.subr.mxu0 0.0
  %74 = vmatpush1.msra.mxu0 %v14
  %75 = vmatprep.subr.mxu0 0.0
  %76 = vmatpush1.msra.mxu0 %v13
  %77 = vmatprep.subr.mxu0 0.0
  %78 = vmatpush2.msra.mxu0 %v44
  %79 = vmatprep.subr.mxu0 0.0
  %80 = vmatpush2.msra.mxu0 %v43
  %81 = vmatprep.subr.mxu0 0.0
  %82 = vmatpush2.msra.mxu0 %v42
  %83 = vmatprep.subr.mxu0 0.0
  %84 = vmatpush2.msra.mxu0 %v41
  %85 = vmatprep.subr.mxu0 0.0
  %86 = vmatpush2.msra.mxu0 %v40
  %87 = vmatprep.subr.mxu0 0.0
  %88 = vmatpush2.msra.mxu0 %v39
  %89 = vmatprep.subr.mxu0 0.0
  %90 = vmatpush2.msra.mxu0 %v38
  %91 = vmatprep.subr.mxu0 0.0
  %92 = vmatpush2.msra.mxu0 %v37
  %93 = vmatprep.subr.mxu0 0.0
  %94 = vmatpush2.msra.mxu0 %v36
  %95 = vmatprep.subr.mxu0 0.0
  %96 = vmatpush2.msra.mxu0 %v35
  %97 = vmatprep.subr.mxu0 0.0
  %98 = vmatpush2.msra.mxu0 %v34
  %99 = vmatprep.subr.mxu0 0.0
  %100 = vmatpush2.msra.mxu0 %v33
  %101 = vmatprep.subr.mxu0 0.0
  %102 = vmatpush2.msra.mxu0 %v32
  %103 = vmatprep.subr.mxu0 0.0
  %104 = vmatpush2.msra.mxu0 %v31
  %105 = vmatprep.subr.mxu0 0.0
  %106 = vmatpush2.msra.mxu0 %v30
  %107 = vmatprep.subr.mxu0 0.0
  %108 = vmatpush2.msra.mxu0 %v29
  %109 = vmatprep.mubr.f32.mxu0 %v12
  %110 = vmatmul.mubr.f32.gmra.mxu0 %v11
  %v111 = vpop.f32.mrf.mxu0
  %v112 = vadd.f32 0.0, %v111
  %v113 = vpop.f32.mrf.mxu0
  %114 = vdwg.mxu0
  %vm115 = vcmask 7168
  %116 = vst.msk [vmem:[%s2] sm:$0xff] %vm115, %v112
  // Predicated region
  $region10: #{tpu_custom_call.1} parent=0 // pred_check
    _
  $region11: #{tpu_custom_call.1} parent=0 // pred_check_branch
    %118 = sbr.rel (0) target = $region13
  $region12: #{tpu_custom_call.1} parent=0 // pred_region
    _
  $region13: #{tpu_custom_call.1} parent=0 // pred_fallthru
    _
  // Predicated region
  $region14: #{tpu_custom_call.1} parent=0 // pred_check
    _
  $region15: #{tpu_custom_call.1} parent=0 // pred_check_branch
    %120 = sbr.rel (0) target = $region17
  $region16: #{tpu_custom_call.1} parent=0 // pred_region
    _
  $region17: #{tpu_custom_call.1} parent=0 // pred_fallthru
    _

</llo_original>
